<compile_context>
chip_gen: v7x
topology: tpu7x:2x2x1
jax: 0.10.0
libtpu: 0.0.40
codegen_flags: <defaults>
</compile_context>

<pallas_src>
import functools

import jax
import jax.numpy as jnp
from jax import lax
from jax.experimental import pallas as pl
from jax.experimental.pallas import tpu as pltpu


# ----------------------------- Pallas kernel --------------------------------


def _cru_kernel(up_ref, low_ref, w_ref, b_ref, o_ref, *,
                img_w, margin, shifts, op_c):
    # up_ref:  (1, up_c, HW + 2*margin)  zero lane-padded flat up branch
    # low_ref: (1, low_c, HW)
    # w_ref:   (2*op_c, n_taps*up_c + low_c)  block-diag fused weight
    # b_ref:   (2*op_c, 1)                    [b_gwc ; 0]
    # o_ref:   (1, op_c, HW)
    up_pad = up_ref[0]                       # (up_c, HW + 2*margin)
    low = low_ref[0]                         # (low_c, HW)
    hw = low.shape[-1]

    # x-coordinate (column) of every flat pixel; used to mask the horizontal
    # wrap that a pure flat shift would otherwise read from the adjacent row.
    xcol = lax.broadcasted_iota(jnp.int32, (1, hw), 1) % img_w
    # One mask per distinct horizontal shift, shared by the taps that use it.
    masks = {}
    for (_, sx) in shifts:
        if sx not in masks and sx != 0:
            if sx > 0:
                masks[sx] = xcol < img_w - sx
            else:
                masks[sx] = xcol >= -sx

    taps = []
    for (sy, sx) in shifts:
        s = sy * img_w + sx                  # flat shift of this conv tap
        t = up_pad[:, margin + s: margin + s + hw]   # static lane slice
        if sx != 0:
            t = jnp.where(masks[sx], t, 0.0)
        taps.append(t)
    # Stacked activation: 9 shifted up-taps + the low branch.
    xstack = jnp.concatenate(taps + [low], axis=0)   # (n_taps*up_c+low_c, HW)

    # ONE matmul covers squeeze1 + GWC + PWC1 (top block) and
    # squeeze2 + [PWC2 ; identity] (bottom block).
    y = jnp.dot(w_ref[...], xstack,
                preferred_element_type=jnp.float32) + b_ref[...]  # (2*op_c,HW)

    # Global average pool per channel, softmax over the 2*op_c channel vector.
    avg = jnp.mean(y, axis=-1, keepdims=True)            # (2*op_c, 1)
    m = jnp.max(avg, axis=0, keepdims=True)
    e = jnp.exp(avg - m)
    att = e / jnp.sum(e, axis=0, keepdims=True)          # (2*op_c, 1)

    # out1 + out2 of the reference == Y1*att_hi + Y2*att_lo.
    o_ref[0] = y[:op_c] * att[:op_c] + y[op_c:] * att[op_c:]


# ------------------------------ wrapper --------------------------------------


def cru_pallas(x_nchw, w_full, b_full, *, up_c, op_c, ks=3):
    N, C, H, W = x_nchw.shape
    HW = H * W
    pad = ks // 2
    margin = pad * W + pad                   # max |flat shift| of any tap
    low_c = C - up_c

    up = x_nchw[:, :up_c].reshape(N, up_c, HW)
    low = x_nchw[:, up_c:].reshape(N, low_c, HW)
    # Only a (W+1)-lane zero pad (no 9x tap duplication in HBM).
    up_pad = jnp.pad(up, ((0, 0), (0, 0), (margin, margin)))

    shifts = tuple((dy - pad, dx - pad) for dy in range(ks) for dx in range(ks))
    kernel = functools.partial(_cru_kernel, img_w=W, margin=margin,
                               shifts=shifts, op_c=op_c)

    out = pl.pallas_call(
        kernel,
        out_shape=jax.ShapeDtypeStruct((N, op_c, HW), jnp.float32),
        grid=(N,),
        in_specs=[
            pl.BlockSpec((1, up_c, HW + 2 * margin), lambda b: (b, 0, 0)),
            pl.BlockSpec((1, low_c, HW), lambda b: (b, 0, 0)),
            pl.BlockSpec(w_full.shape, lambda b: (0, 0)),
            pl.BlockSpec(b_full.shape, lambda b: (0, 0)),
        ],
        out_specs=pl.BlockSpec((1, op_c, HW), lambda b: (b, 0, 0)),
        compiler_params=pltpu.CompilerParams(
            dimension_semantics=("parallel",)),
    )(up_pad, low, w_full, b_full)

    return out.reshape(N, op_c, H, W)


# --------------------- parameters & weight fusion -----------------------------


def make_params(key, op_channel, alpha=0.5, squeeze_radio=2, group_size=2,
                ks=3):
    up_c = int(alpha * op_channel)
    low_c = op_channel - up_c
    u_s = up_c // squeeze_radio
    l_s = low_c // squeeze_radio
    k1, k2, k3, k4, k5, k6 = jax.random.split(key, 6)

    # PyTorch conv-weight layouts (out, in, kh, kw)
    w_sq1 = 0.1 * jax.random.normal(k1, (u_s, up_c, 1, 1), jnp.float32)
    w_sq2 = 0.1 * jax.random.normal(k2, (l_s, low_c, 1, 1), jnp.float32)
    w_gwc = 0.1 * jax.random.normal(
        k3, (op_channel, u_s // group_size, ks, ks), jnp.float32)
    b_gwc = 0.1 * jax.random.normal(k4, (op_channel,), jnp.float32)
    w_pwc1 = 0.1 * jax.random.normal(k5, (op_channel, u_s, 1, 1), jnp.float32)
    w_pwc2 = 0.1 * jax.random.normal(
        k6, (op_channel - l_s, l_s, 1, 1), jnp.float32)

    # Dense block-diagonal expansion of the grouped 3x3 conv weight (exactly
    # equivalent to groups=group_size with PyTorch's contiguous grouping).
    og = op_channel // group_size
    ig = u_s // group_size
    w_gwc_dense = jnp.zeros((op_channel, u_s, ks, ks), jnp.float32)
    for g in range(group_size):
        w_gwc_dense = w_gwc_dense.at[g * og:(g + 1) * og,
                                     g * ig:(g + 1) * ig].set(
                                         w_gwc[g * og:(g + 1) * og])

    return dict(
        S1=w_sq1[:, :, 0, 0],            # (u_s, up_c)
        S2=w_sq2[:, :, 0, 0],            # (l_s, low_c)
        W_gwc_dense=w_gwc_dense,         # (op_c, u_s, ks, ks)
        b_gwc=b_gwc,                     # (op_c,)
        P1=w_pwc1[:, :, 0, 0],           # (op_c, u_s)
        P2=w_pwc2[:, :, 0, 0],           # (op_c - l_s, l_s)
        up_c=up_c, low_c=low_c, ks=ks, op_c=op_channel,
    )


def fuse_params(p):
    """Constant-fold all linear ops into one block-diagonal weight (exact)."""
    S1, S2, Wg, P1, P2 = p["S1"], p["S2"], p["W_gwc_dense"], p["P1"], p["P2"]
    ks, op_c, up_c, low_c = p["ks"], p["op_c"], p["up_c"], p["low_c"]
    c = ks // 2
    blocks = []
    for dy in range(ks):
        for dx in range(ks):
            A = Wg[:, :, dy, dx] @ S1                    # (op_c, up_c)
            if dy == c and dx == c:
                A = A + P1 @ S1                          # PWC1 folded in
            blocks.append(A)
    w_up = jnp.concatenate(blocks, axis=1)               # (op_c, ks*ks*up_c)
    w_low = jnp.concatenate([P2 @ S2, S2], axis=0)       # (op_c, low_c)

    # Block-diagonal assembly -> a single matmul in the kernel.
    n_up = ks * ks * up_c
    w_full = jnp.zeros((2 * op_c, n_up + low_c), jnp.float32)
    w_full = w_full.at[:op_c, :n_up].set(w_up)
    w_full = w_full.at[op_c:, n_up:].set(w_low)
    b_full = jnp.concatenate(
        [p["b_gwc"], jnp.zeros((op_c,), jnp.float32)]).reshape(-1, 1)
    return w_full, b_full


# -------------------------- pure-JAX reference --------------------------------


def cru_reference(x_nchw, p):
    up_c = p["up_c"]
    up, low = x_nchw[:, :up_c], x_nchw[:, up_c:]
    dn = ("NCHW", "OIHW", "NCHW")

    def conv1x1(v, w):
        return lax.conv_general_dilated(v, w[:, :, None, None], (1, 1),
                                        "VALID", dimension_numbers=dn)

    up_s = conv1x1(up, p["S1"])
    low_s = conv1x1(low, p["S2"])
    gwc = lax.conv_general_dilated(up_s, p["W_gwc_dense"], (1, 1), "SAME",
                                   dimension_numbers=dn)
    gwc = gwc + p["b_gwc"][None, :, None, None]
    Y1 = gwc + conv1x1(up_s, p["P1"])
    Y2 = jnp.concatenate([conv1x1(low_s, p["P2"]), low_s], axis=1)
    out = jnp.concatenate([Y1, Y2], axis=1)
    att = jax.nn.softmax(jnp.mean(out, axis=(2, 3), keepdims=True), axis=1)
    out = out * att
    half = out.shape[1] // 2
    return out[:, :half] + out[:, half:]


# --------------------------------- main ---------------------------------------


if __name__ == "__main__":
    key = jax.random.PRNGKey(0)
    kx, kp = jax.random.split(key)

    op_channel = 16
    N, H, W = 2, 16, 16

    # Module input layout is NCHW, same as the PyTorch reference.
    x = jax.random.normal(kx, (N, op_channel, H, W), jnp.float32)

    params = make_params(kp, op_channel)
    w_full, b_full = fuse_params(params)

    y = cru_pallas(x, w_full, b_full, up_c=params["up_c"],
                   op_c=params["op_c"], ks=params["ks"])
    y = jax.block_until_ready(y)

    y_ref = cru_reference(x, params)
    max_err = float(jnp.max(jnp.abs(y - y_ref)))
    assert jnp.allclose(y, y_ref, atol=1e-4, rtol=1e-4), f"max_err={max_err}"

    print("KERNEL_OK")
</pallas_src>

<mosaic_0001>
module attributes {stable_mosaic.version = 11 : i64} {
  func.func @_cru_kernel(%arg0: i32, %arg1: memref<1x8x290xf32, #tpu.memory_space<vmem>>, %arg2: memref<1x8x256xf32, #tpu.memory_space<vmem>>, %arg3: memref<32x80xf32, #tpu.memory_space<vmem>>, %arg4: memref<32x1xf32, #tpu.memory_space<vmem>>, %arg5: memref<1x16x256xf32, #tpu.memory_space<vmem>>) attributes {dimension_semantics = [#tpu.dimension_semantics<parallel>], iteration_bounds = array<i64: 2>, scalar_prefetch = 0 : i64, scratch_operands = 0 : i64, tpu.core_type = #tpu.core_type<tc>, window_params = [{transform_indices = @transform_0, window_bounds = array<i64: 1, 8, 290>}, {transform_indices = @transform_1, window_bounds = array<i64: 1, 8, 256>}, {pipeline_mode = #tpu.pipeline_mode<synchronous>, transform_indices = @transform_2, window_bounds = array<i64: 32, 80>}, {pipeline_mode = #tpu.pipeline_mode<synchronous>, transform_indices = @transform_3, window_bounds = array<i64: 32, 1>}, {transform_indices = @transform_4, window_bounds = array<i64: 1, 16, 256>}]} {
    %c0 = arith.constant 0 : index
    %c0_0 = arith.constant 0 : index
    %c0_1 = arith.constant 0 : index
    %0 = vector.load %arg1[%c0, %c0_0, %c0_1] : memref<1x8x290xf32, #tpu.memory_space<vmem>>, vector<1x8x290xf32>
    %1 = vector.shape_cast %0 : vector<1x8x290xf32> to vector<8x290xf32>
    %c0_2 = arith.constant 0 : index
    %c0_3 = arith.constant 0 : index
    %c0_4 = arith.constant 0 : index
    %2 = vector.load %arg2[%c0_2, %c0_3, %c0_4] : memref<1x8x256xf32, #tpu.memory_space<vmem>>, vector<1x8x256xf32>
    %3 = vector.shape_cast %2 : vector<1x8x256xf32> to vector<8x256xf32>
    %4 = tpu.iota {dimensions = array<i32: 1>} : vector<1x256xi32>
    %c16_i32 = arith.constant 16 : i32
    %c0_i32 = arith.constant 0 : i32
    %5 = arith.cmpi eq, %c16_i32, %c0_i32 : i32
    %c1_i32 = arith.constant 1 : i32
    %6 = arith.select %5, %c1_i32, %c16_i32 : i32
    %7 = vector.broadcast %6 : i32 to vector<1x256xi32>
    %8 = arith.remsi %4, %7 : vector<1x256xi32>
    %c0_i32_5 = arith.constant 0 : i32
    %9 = vector.broadcast %c0_i32_5 : i32 to vector<1x256xi32>
    %10 = arith.cmpi ne, %8, %9 : vector<1x256xi32>
    %c0_i32_6 = arith.constant 0 : i32
    %11 = vector.broadcast %c0_i32_6 : i32 to vector<1x256xi32>
    %12 = arith.cmpi slt, %8, %11 : vector<1x256xi32>
    %c0_i32_7 = arith.constant 0 : i32
    %13 = arith.cmpi slt, %6, %c0_i32_7 : i32
    %14 = vector.broadcast %13 : i1 to vector<1x256xi1>
    %15 = vector.broadcast %14 : vector<1x256xi1> to vector<1x256xi1>
    %16 = arith.xori %12, %15 : vector<1x256xi1>
    %17 = arith.andi %16, %10 : vector<1x256xi1>
    %18 = vector.broadcast %6 : i32 to vector<1x256xi32>
    %19 = arith.addi %8, %18 : vector<1x256xi32>
    %20 = arith.select %17, %19, %8 : vector<1x256xi1>, vector<1x256xi32>
    %c1_i32_8 = arith.constant 1 : i32
    %21 = vector.broadcast %c1_i32_8 : i32 to vector<1x256xi32>
    %22 = arith.cmpi sge, %20, %21 : vector<1x256xi32>
    %c15_i32 = arith.constant 15 : i32
    %23 = vector.broadcast %c15_i32 : i32 to vector<1x256xi32>
    %24 = arith.cmpi slt, %20, %23 : vector<1x256xi32>
    %25 = vector.extract_strided_slice %1 {offsets = [0, 0], sizes = [8, 256], strides = [1, 1]} : vector<8x290xf32> to vector<8x256xf32>
    %cst = arith.constant 0.000000e+00 : f32
    %26 = vector.shape_cast %22 : vector<1x256xi1> to vector<1x256xi1>
    %27 = vector.broadcast %26 : vector<1x256xi1> to vector<8x256xi1>
    %28 = vector.broadcast %cst : f32 to vector<8x256xf32>
    %29 = arith.select %27, %25, %28 : vector<8x256xi1>, vector<8x256xf32>
    %30 = vector.extract_strided_slice %1 {offsets = [0, 1], sizes = [8, 256], strides = [1, 1]} : vector<8x290xf32> to vector<8x256xf32>
    %31 = vector.extract_strided_slice %1 {offsets = [0, 2], sizes = [8, 256], strides = [1, 1]} : vector<8x290xf32> to vector<8x256xf32>
    %cst_9 = arith.constant 0.000000e+00 : f32
    %32 = vector.shape_cast %24 : vector<1x256xi1> to vector<1x256xi1>
    %33 = vector.broadcast %32 : vector<1x256xi1> to vector<8x256xi1>
    %34 = vector.broadcast %cst_9 : f32 to vector<8x256xf32>
    %35 = arith.select %33, %31, %34 : vector<8x256xi1>, vector<8x256xf32>
    %36 = vector.extract_strided_slice %1 {offsets = [0, 16], sizes = [8, 256], strides = [1, 1]} : vector<8x290xf32> to vector<8x256xf32>
    %cst_10 = arith.constant 0.000000e+00 : f32
    %37 = vector.shape_cast %22 : vector<1x256xi1> to vector<1x256xi1>
    %38 = vector.broadcast %37 : vector<1x256xi1> to vector<8x256xi1>
    %39 = vector.broadcast %cst_10 : f32 to vector<8x256xf32>
    %40 = arith.select %38, %36, %39 : vector<8x256xi1>, vector<8x256xf32>
    %41 = vector.extract_strided_slice %1 {offsets = [0, 17], sizes = [8, 256], strides = [1, 1]} : vector<8x290xf32> to vector<8x256xf32>
    %42 = vector.extract_strided_slice %1 {offsets = [0, 18], sizes = [8, 256], strides = [1, 1]} : vector<8x290xf32> to vector<8x256xf32>
    %cst_11 = arith.constant 0.000000e+00 : f32
    %43 = vector.shape_cast %24 : vector<1x256xi1> to vector<1x256xi1>
    %44 = vector.broadcast %43 : vector<1x256xi1> to vector<8x256xi1>
    %45 = vector.broadcast %cst_11 : f32 to vector<8x256xf32>
    %46 = arith.select %44, %42, %45 : vector<8x256xi1>, vector<8x256xf32>
    %47 = vector.extract_strided_slice %1 {offsets = [0, 32], sizes = [8, 256], strides = [1, 1]} : vector<8x290xf32> to vector<8x256xf32>
    %cst_12 = arith.constant 0.000000e+00 : f32
    %48 = vector.shape_cast %22 : vector<1x256xi1> to vector<1x256xi1>
    %49 = vector.broadcast %48 : vector<1x256xi1> to vector<8x256xi1>
    %50 = vector.broadcast %cst_12 : f32 to vector<8x256xf32>
    %51 = arith.select %49, %47, %50 : vector<8x256xi1>, vector<8x256xf32>
    %52 = vector.extract_strided_slice %1 {offsets = [0, 33], sizes = [8, 256], strides = [1, 1]} : vector<8x290xf32> to vector<8x256xf32>
    %53 = vector.extract_strided_slice %1 {offsets = [0, 34], sizes = [8, 256], strides = [1, 1]} : vector<8x290xf32> to vector<8x256xf32>
    %cst_13 = arith.constant 0.000000e+00 : f32
    %54 = vector.shape_cast %24 : vector<1x256xi1> to vector<1x256xi1>
    %55 = vector.broadcast %54 : vector<1x256xi1> to vector<8x256xi1>
    %56 = vector.broadcast %cst_13 : f32 to vector<8x256xf32>
    %57 = arith.select %55, %53, %56 : vector<8x256xi1>, vector<8x256xf32>
    %58 = tpu.concatenate %29, %30, %35, %40, %41, %46, %51, %52, %57, %3 in 0 : vector<8x256xf32>, vector<8x256xf32>, vector<8x256xf32>, vector<8x256xf32>, vector<8x256xf32>, vector<8x256xf32>, vector<8x256xf32>, vector<8x256xf32>, vector<8x256xf32>, vector<8x256xf32> -> vector<80x256xf32>
    %c0_14 = arith.constant 0 : index
    %c0_15 = arith.constant 0 : index
    %59 = vector.load %arg3[%c0_14, %c0_15] : memref<32x80xf32, #tpu.memory_space<vmem>>, vector<32x80xf32>
    %cst_16 = arith.constant dense<0.000000e+00> : vector<32x256xf32>
    %60 = tpu.matmul %59, %58, %cst_16 {dimension_numbers = #tpu.dot_dimension_numbers<[1], [0], [0], [1], [0, 0, 1, 1], [], []>} : vector<32x80xf32>, vector<80x256xf32>, vector<32x256xf32> -> vector<32x256xf32>
    %c0_17 = arith.constant 0 : index
    %c0_18 = arith.constant 0 : index
    %61 = vector.load %arg4[%c0_17, %c0_18] : memref<32x1xf32, #tpu.memory_space<vmem>>, vector<32x1xf32>
    %62 = vector.broadcast %61 : vector<32x1xf32> to vector<32x256xf32>
    %63 = arith.addf %60, %62 : vector<32x256xf32>
    %cst_19 = arith.constant dense<0.000000e+00> : vector<32xf32>
    %64 = vector.multi_reduction <add>, %63, %cst_19 [1] : vector<32x256xf32> to vector<32xf32>
    %65 = vector.shape_cast %64 : vector<32xf32> to vector<32x1xf32>
    %cst_20 = arith.constant 2.560000e+02 : f32
    %66 = vector.broadcast %cst_20 : f32 to vector<32x1xf32>
    %67 = arith.divf %65, %66 : vector<32x1xf32>
    %cst_21 = arith.constant dense<0xFF800000> : vector<1xf32>
    %68 = vector.multi_reduction <maximumf>, %67, %cst_21 [0] : vector<32x1xf32> to vector<1xf32>
    %69 = vector.shape_cast %68 : vector<1xf32> to vector<1x1xf32>
    %70 = vector.broadcast %69 : vector<1x1xf32> to vector<32x1xf32>
    %71 = arith.subf %67, %70 : vector<32x1xf32>
    %72 = math.exp %71 : vector<32x1xf32>
    %cst_22 = arith.constant dense<0.000000e+00> : vector<1xf32>
    %73 = vector.multi_reduction <add>, %72, %cst_22 [0] : vector<32x1xf32> to vector<1xf32>
    %74 = vector.shape_cast %73 : vector<1xf32> to vector<1x1xf32>
    %75 = vector.broadcast %74 : vector<1x1xf32> to vector<32x1xf32>
    %76 = arith.divf %72, %75 : vector<32x1xf32>
    %77 = vector.extract_strided_slice %63 {offsets = [0, 0], sizes = [16, 256], strides = [1, 1]} : vector<32x256xf32> to vector<16x256xf32>
    %78 = vector.extract_strided_slice %76 {offsets = [0, 0], sizes = [16, 1], strides = [1, 1]} : vector<32x1xf32> to vector<16x1xf32>
    %79 = vector.broadcast %78 : vector<16x1xf32> to vector<16x256xf32>
    %80 = arith.mulf %77, %79 : vector<16x256xf32>
    %81 = vector.extract_strided_slice %63 {offsets = [16, 0], sizes = [16, 256], strides = [1, 1]} : vector<32x256xf32> to vector<16x256xf32>
    %82 = vector.extract_strided_slice %76 {offsets = [16, 0], sizes = [16, 1], strides = [1, 1]} : vector<32x1xf32> to vector<16x1xf32>
    %83 = vector.broadcast %82 : vector<16x1xf32> to vector<16x256xf32>
    %84 = arith.mulf %81, %83 : vector<16x256xf32>
    %85 = arith.addf %80, %84 : vector<16x256xf32>
    %c0_23 = arith.constant 0 : index
    %c0_24 = arith.constant 0 : index
    %c0_25 = arith.constant 0 : index
    %86 = vector.load %arg5[%c0_23, %c0_24, %c0_25] : memref<1x16x256xf32, #tpu.memory_space<vmem>>, vector<1x16x256xf32>
    %87 = vector.shape_cast %86 : vector<1x16x256xf32> to vector<16x256xf32>
    %88 = vector.shape_cast %85 : vector<16x256xf32> to vector<1x16x256xf32>
    tpu.vector_store %arg5[%c0_23, %c0_24, %c0_25], %88 {strides = array<i32>} : memref<1x16x256xf32, #tpu.memory_space<vmem>>, vector<1x16x256xf32>,
    return
  }
  func.func @transform_0(%arg0: i32) -> (i32, i32, i32) {
    %c0_i32 = arith.constant 0 : i32
    %c0_i32_0 = arith.constant 0 : i32
    %c0_i32_1 = arith.constant 0 : i32
    return %arg0, %c0_i32, %c0_i32_0 : i32, i32, i32
  }
  func.func @transform_1(%arg0: i32) -> (i32, i32, i32) {
    %c0_i32 = arith.constant 0 : i32
    %c0_i32_0 = arith.constant 0 : i32
    %c0_i32_1 = arith.constant 0 : i32
    return %arg0, %c0_i32, %c0_i32_0 : i32, i32, i32
  }
  func.func @transform_2(%arg0: i32) -> (i32, i32) {
    %c0_i32 = arith.constant 0 : i32
    %c0_i32_0 = arith.constant 0 : i32
    %c0_i32_1 = arith.constant 0 : i32
    return %c0_i32, %c0_i32_0 : i32, i32
  }
  func.func @transform_3(%arg0: i32) -> (i32, i32) {
    %c0_i32 = arith.constant 0 : i32
    %c0_i32_0 = arith.constant 0 : i32
    %c0_i32_1 = arith.constant 0 : i32
    return %c0_i32, %c0_i32_0 : i32, i32
  }
  func.func @transform_4(%arg0: i32) -> (i32, i32, i32) {
    %c0_i32 = arith.constant 0 : i32
    %c0_i32_0 = arith.constant 0 : i32
    %c0_i32_1 = arith.constant 0 : i32
    return %arg0, %c0_i32, %c0_i32_0 : i32, i32, i32
  }
}

</mosaic_0001>

<llo_original>
// kernel: tpu_custom_call.1
$region0: #{tpu_custom_call.1}
  #allocation0 [shape = 'u32[]', space=smem, size = 0x4, offset = 0x4, fixed_abs, tag = 'smem constant byte address 0x4 - core index']
  #allocation1 [shape = 'u32[144,128]{1,0:T(1,128)}', space=vmem, size = 0x12000, scoped, tag = 'internal scratch']
  %s0 = inlined_call_operand.hbm [shape: f32[2,8,290], index: 0, kind: input, shape index: {}]
  %s1 = inlined_call_operand.vmem [shape: f32[2,8,256], index: 1, kind: input, shape index: {}]
  %s2 = inlined_call_operand.hbm [shape: f32[32,80], index: 2, kind: input, shape index: {}]
  %s3 = inlined_call_operand.vmem [shape: f32[32,1], index: 3, kind: input, shape index: {}]
  %s4 = inlined_call_operand.hbm [shape: f32[2,16,256], index: 4, kind: output, shape index: {}]
  %s5 = sld [smem:[#allocation0]]
  $region57: #{tpu_custom_call.1} parent=0
    _
  %s7 = ssub.s32 1, %s5
  %s8 = scalar_select 0, %s7, %s5
  $region1: #{tpu_custom_call.1} parent=0
    #allocation2 [shape = 'u8[24576]{0}', space=vmem, size = 0x6000, scoped, tag = 'input window, operand 0']
    #allocation3 [shape = 's32[2]{0}', space=sflag, size = 0x8, scoped, tag = 'scoped memory for tpu_custom_call.1']
    #allocation4 [shape = 's32[2]{0}', space=sflag, size = 0x8, scoped, tag = 'scoped memory for tpu_custom_call.1']
    #allocation5 [shape = 'u8[16384]{0}', space=vmem, size = 0x4000, scoped, tag = 'input window, operand 2, single buffered']
    #allocation6 [shape = 's32[1]{0}', space=sflag, size = 0x4, scoped, tag = 'scoped memory for tpu_custom_call.1']
    #allocation7 [shape = 'u8[32768]{0}', space=vmem, size = 0x8000, scoped, tag = 'output window, operand 0']
    %9 = vsyncpa [#allocation3], 0
    %s10 = scalar_lea.sflag [#allocation3], 1
    %11 = vsyncpa %s10, 0
    %12 = vsyncpa [#allocation6], 0
    %13 = vsyncpa [#allocation4], 0
    %s14 = scalar_lea.sflag [#allocation4], 1
    %15 = vsyncpa %s14, 0
    loop: start=0, step=1, limit=4
    $region2: #{tpu_custom_call.1} parent=1 // loop_pre_header
      _
    $region3: #{tpu_custom_call.1} parent=1 // loop_header
      %s17 = sphi 0, %s21
      %p18 = scmp.ge.s32.totalorder %s17, 4
      %s27 = sphi 0, %s29
      %s30 = sphi 0, %s27
      %s31 = sphi 0, %s30
      %s47 = sphi 0, %s31
      %s53 = sphi 0, %s55
      %s56 = sphi 0, %s53
      %s57 = sphi 0, %s56
      %s73 = sphi 0, %s57
      %s77 = sphi 0, %s77
      %s79 = sphi 0, %s77
      %s80 = sphi 0, %s79
      %s94 = sphi 0, %s80
      %s98 = sphi 0, %s98
      %s100 = sphi 0, %s98
      %s101 = sphi 0, %s100
      %s115 = sphi 0, %s101
      %s121 = sphi 0, %s123
      %s124 = sphi 0, %s121
      %s125 = sphi 0, %s124
      %s141 = sphi 0, %s125
    $region4: #{tpu_custom_call.1} parent=1 // loop_header_branch
      %20 = sbr.rel (%p18) target = $region8
    $region5: #{tpu_custom_call.1} parent=1 // loop_body
      %s22 = ssub.s32 %s17, 1
      %s23 = ssub.s32 %s17, 2
      %s24 = sadd.s32 %s17, 1
      %s25 = ssub.s32 %s17, %s24
      %p26 = scmp.eq.s32.totalorder %s25, 0
      %s28 = sadd.s32 %s27, 1
      %s29 = scalar_select %p26, %s27, %s28
      %p32 = pneg %p26
      %p33 = scmp.eq.s32.totalorder %s17, 1
      %p34 = por %p32, %p33
      %p35 = scmp.ne.s32.totalorder %s27, %s30
      %p36 = scmp.eq.s32.totalorder %s17, 0
      %p37 = por %p35, %p36
      %p38 = scmp.ne.s32.totalorder %s27, %s30
      %p39 = scmp.eq.s32.totalorder %s22, 1
      %p40 = por %p38, %p39
      %p41 = scmp.ne.s32.totalorder %s30, %s31
      %p42 = scmp.eq.s32.totalorder %s22, 0
      %p43 = por %p41, %p42
      %p44 = scmp.ne.s32.totalorder %s30, %s31
      %p45 = scmp.eq.s32.totalorder %s23, 1
      %p46 = por %p44, %p45
      %p48 = scmp.ne.s32.totalorder %s31, %s47
      %p49 = scmp.eq.s32.totalorder %s23, 0
      %p50 = por %p48, %p49
      %s51 = ssub.s32 %s17, %s24
      %p52 = scmp.eq.s32.totalorder %s51, 0
      %s54 = sadd.s32 %s53, 1
      %s55 = scalar_select %p52, %s53, %s54
      %p58 = pneg %p52
      %p59 = scmp.eq.s32.totalorder %s17, 1
      %p60 = por %p58, %p59
      %p61 = scmp.ne.s32.totalorder %s53, %s56
      %p62 = scmp.eq.s32.totalorder %s17, 0
      %p63 = por %p61, %p62
      %p64 = scmp.ne.s32.totalorder %s53, %s56
      %p65 = scmp.eq.s32.totalorder %s22, 1
      %p66 = por %p64, %p65
      %p67 = scmp.ne.s32.totalorder %s56, %s57
      %p68 = scmp.eq.s32.totalorder %s22, 0
      %p69 = por %p67, %p68
      %p70 = scmp.ne.s32.totalorder %s56, %s57
      %p71 = scmp.eq.s32.totalorder %s23, 1
      %p72 = por %p70, %p71
      %p74 = scmp.ne.s32.totalorder %s57, %s73
      %p75 = scmp.eq.s32.totalorder %s23, 0
      %p76 = por %p74, %p75
      %s78 = sadd.s32 %s77, 1
      %p81 = scmp.eq.s32.totalorder %s17, 1
      %p82 = scmp.ne.s32.totalorder %s77, %s79
      %p83 = scmp.eq.s32.totalorder %s17, 0
      %p84 = por %p82, %p83
      %p85 = scmp.ne.s32.totalorder %s77, %s79
      %p86 = scmp.eq.s32.totalorder %s22, 1
      %p87 = por %p85, %p86
      %p88 = scmp.ne.s32.totalorder %s79, %s80
      %p89 = scmp.eq.s32.totalorder %s22, 0
      %p90 = por %p88, %p89
      %p91 = scmp.ne.s32.totalorder %s79, %s80
      %p92 = scmp.eq.s32.totalorder %s23, 1
      %p93 = por %p91, %p92
      %p95 = scmp.ne.s32.totalorder %s80, %s94
      %p96 = scmp.eq.s32.totalorder %s23, 0
      %p97 = por %p95, %p96
      %s99 = sadd.s32 %s98, 1
      %p102 = scmp.eq.s32.totalorder %s17, 1
      %p103 = scmp.ne.s32.totalorder %s98, %s100
      %p104 = scmp.eq.s32.totalorder %s17, 0
      %p105 = por %p103, %p104
      %p106 = scmp.ne.s32.totalorder %s98, %s100
      %p107 = scmp.eq.s32.totalorder %s22, 1
      %p108 = por %p106, %p107
      %p109 = scmp.ne.s32.totalorder %s100, %s101
      %p110 = scmp.eq.s32.totalorder %s22, 0
      %p111 = por %p109, %p110
      %p112 = scmp.ne.s32.totalorder %s100, %s101
      %p113 = scmp.eq.s32.totalorder %s23, 1
      %p114 = por %p112, %p113
      %p116 = scmp.ne.s32.totalorder %s101, %s115
      %p117 = scmp.eq.s32.totalorder %s23, 0
      %p118 = por %p116, %p117
      %s119 = ssub.s32 %s17, %s24
      %p120 = scmp.eq.s32.totalorder %s119, 0
      %s122 = sadd.s32 %s121, 1
      %s123 = scalar_select %p120, %s121, %s122
      %p126 = pneg %p120
      %p127 = scmp.eq.s32.totalorder %s17, 1
      %p128 = por %p126, %p127
      %p129 = scmp.ne.s32.totalorder %s121, %s124
      %p130 = scmp.eq.s32.totalorder %s17, 0
      %p131 = por %p129, %p130
      %p132 = scmp.ne.s32.totalorder %s121, %s124
      %p133 = scmp.eq.s32.totalorder %s22, 1
      %p134 = por %p132, %p133
      %p135 = scmp.ne.s32.totalorder %s124, %s125
      %p136 = scmp.eq.s32.totalorder %s22, 0
      %p137 = por %p135, %p136
      %p138 = scmp.ne.s32.totalorder %s124, %s125
      %p139 = scmp.eq.s32.totalorder %s23, 1
      %p140 = por %p138, %p139
      %p142 = scmp.ne.s32.totalorder %s125, %s141
      %p143 = scmp.eq.s32.totalorder %s23, 0
      %p144 = por %p142, %p143
      %p145 = scmp.le.s32.totalorder 1, %s17
      %p146 = scmp.lt.s32.totalorder %s17, 3
      %p147 = pnand %p145, %p146
      %p148 = pneg %p147
      // Predicated region
      $region9: #{tpu_custom_call.1} parent=5 // pred_check
        _
      $region10: #{tpu_custom_call.1} parent=5 // pred_check_branch
        %150 = sbr.rel (%p147) target = $region12
      $region11: #{tpu_custom_call.1} parent=5 // pred_region
        %s151 = ssub.s32 %s17, 1
        // Predicated region
        $region13: #{tpu_custom_call.1} parent=11 // pred_check
          %p152 = pneg %p90
        $region14: #{tpu_custom_call.1} parent=11 // pred_check_branch
          %154 = sbr.rel (%p152) target = $region16
        $region15: #{tpu_custom_call.1} parent=11 // pred_region
          %s156 = ssub.s32 512, 512
          %157 = vsyncadd [#allocation6], %s156
          %s158 = sshll.u32 [#allocation5], 4
          %s159 = int_to_ptr.vmem [resolvable:$true] %s158
          %164 = dma.hbm_to_vmem [thread:$0]  %s2, 512, %s159, [#allocation6], 128, 128, 8
        $region16: #{tpu_custom_call.1} parent=11 // pred_fallthru
          _
        // Predicated region
        $region17: #{tpu_custom_call.1} parent=11 // pred_check
          %p165 = pneg %p111
        $region18: #{tpu_custom_call.1} parent=11 // pred_check_branch
          %167 = sbr.rel (%p165) target = $region20
        $region19: #{tpu_custom_call.1} parent=11 // pred_region
          _
        $region20: #{tpu_custom_call.1} parent=11 // pred_fallthru
          _
      $region12: #{tpu_custom_call.1} parent=5 // pred_fallthru
        _
      %p168 = scmp.lt.s32.totalorder %s17, 2
      // Predicated region
      $region21: #{tpu_custom_call.1} parent=5 // pred_check
        %p169 = pneg %p168
      $region22: #{tpu_custom_call.1} parent=5 // pred_check_branch
        %171 = sbr.rel (%p169) target = $region24
      $region23: #{tpu_custom_call.1} parent=5 // pred_region
        // Predicated region
        $region25: #{tpu_custom_call.1} parent=23 // pred_check
          %p172 = pneg %p37
        $region26: #{tpu_custom_call.1} parent=23 // pred_check_branch
          %174 = sbr.rel (%p172) target = $region28
        $region27: #{tpu_custom_call.1} parent=23 // pred_region
          %s175 = sand.u32 %s27, 1
          %s176 = scalar_lea.sflag [#allocation3], %s175
          %s177 = sand.u32 %s27, 1
          %s178 = smul.addr %s177, 24
          %s179 = scalar_lea.vmem [#allocation2], %s178
          %s181 = ssub.s32 384, 384
          %182 = vsyncadd %s176, %s181
          %s183 = smul.addr %s17, 3
          %s184 = smul.addr %s183, 128
          %s185 = scalar_lea.hbm %s0, %s184
          %s187 = sshll.u32 %s179, 4
          %s188 = int_to_ptr.vmem [resolvable:$true] %s187
          %190 = dma.hbm_to_vmem [thread:$0]  %s185, 384, %s188, %s176
        $region28: #{tpu_custom_call.1} parent=23 // pred_fallthru
          _
        // Predicated region
        $region29: #{tpu_custom_call.1} parent=23 // pred_check
          %p191 = pneg %p63
        $region30: #{tpu_custom_call.1} parent=23 // pred_check_branch
          %193 = sbr.rel (%p191) target = $region32
        $region31: #{tpu_custom_call.1} parent=23 // pred_region
          %p194 = scmp.lt.s32.totalorder %s17, 1
          %s195 = scalar_select %p194, %s17, 1
          %s196 = smul.addr %s195, 2
          %s197 = smul.addr %s196, 8
          %s198 = scalar_lea.vmem %s1, %s197
        $region32: #{tpu_custom_call.1} parent=23 // pred_fallthru
          _
      $region24: #{tpu_custom_call.1} parent=5 // pred_fallthru
        _
      %p199 = scmp.le.s32.totalorder 1, %s17
      %p200 = scmp.lt.s32.totalorder %s17, 3
      %p201 = pnand %p199, %p200
      %p202 = pneg %p201
      // Predicated region
      $region33: #{tpu_custom_call.1} parent=5 // pred_check
        _
      $region34: #{tpu_custom_call.1} parent=5 // pred_check_branch
        %204 = sbr.rel (%p201) target = $region36
      $region35: #{tpu_custom_call.1} parent=5 // pred_region
        %s205 = ssub.s32 %s17, 1
        %s206 = sand.u32 %s30, 1
        %s207 = scalar_lea.sflag [#allocation3], %s206
        %s208 = sand.u32 %s30, 1
        %s209 = smul.addr %s208, 24
        %s210 = scalar_lea.vmem [#allocation2], %s209
        // Predicated region
        $region37: #{tpu_custom_call.1} parent=35 // pred_check
          %p211 = pneg %p43
        $region38: #{tpu_custom_call.1} parent=35 // pred_check_branch
          %213 = sbr.rel (%p211) target = $region40
        $region39: #{tpu_custom_call.1} parent=35 // pred_region
          %214 = dma.done %s207, 384
        $region40: #{tpu_custom_call.1} parent=35 // pred_fallthru
          _
        // Predicated region
        $region41: #{tpu_custom_call.1} parent=35 // pred_check
          %p215 = pneg %p90
        $region42: #{tpu_custom_call.1} parent=35 // pred_check_branch
          %217 = sbr.rel (%p215) target = $region44
        $region43: #{tpu_custom_call.1} parent=35 // pred_region
          %218 = dma.done [#allocation6], 512
        $region44: #{tpu_custom_call.1} parent=35 // pred_fallthru
          _
        %s219 = sand.u32 %s30, 1
        %s220 = scalar_lea.sflag [#allocation3], %s219
        %s221 = sand.u32 %s30, 1
        %s222 = smul.addr %s221, 24
        %s223 = scalar_lea.vmem [#allocation2], %s222
        %p224 = pneg %p43
        %p225 = pneg %p40
        %p226 = scmp.lt.s32.totalorder %s22, 1
        %s227 = scalar_select %p226, %s22, 1
        %s228 = smul.addr %s227, 2
        %s229 = smul.addr %s228, 8
        %s230 = scalar_lea.vmem %s1, %s229
        %p231 = pneg %p69
        %p232 = pneg %p66
        %p233 = pneg %p90
        %p234 = pneg %p87
        %p235 = pneg %p111
        %p236 = pneg %p108
        %p237 = pneg %p137
        %p238 = pneg %p134
        %s239 = sand.u32 %s124, 1
        %s240 = scalar_lea.sflag [#allocation4], %s239
        %s241 = sand.u32 %s124, 1
        %s242 = smul.addr %s241, 32
        %s243 = scalar_lea.vmem [#allocation7], %s242
        %p244 = scmp.lt.s32.totalorder %s22, 1
        %s245 = scalar_select %p244, %s22, 1
        %s246 = smul.addr %s245, 2
        %s247 = smul.addr %s246, 8
        %s248 = scalar_lea.vmem %s1, %s247
        %v249 = vld [vmem:[%s210] sm:$0xff]
        %v250 = vld [vmem:[%s210 + $0x8] sm:$0xff]
        %v251 = vld [vmem:[%s210 + $0x10] sm:$0xff]
        %v252 = vld [vmem:[%s248] sm:$0xff]
        %v253 = vld [vmem:[%s248 + $0x8] sm:$0xff]
        %v254 = vlaneseq
        %v255 = vand.u32 %v254, 127
        %v256 = vadd.s32 %v255, 128
        %vm257 = vcmp.lt.s32.totalorder %v255, 0
        %v258 = vsub.s32 0, %v255
        %v259 = vsel %vm257, %v258, %v255
        %v260 = vshrl.u32 %v259, 4
        %v261 = vand.u32 %v259, 15
        %v262 = vsub.s32 0, %v261
        %v263 = vsel %vm257, %v262, %v261
        %vm264 = vcmp.lt.s32.totalorder %v256, 0
        %v265 = vsub.s32 0, %v256
        %v266 = vsel %vm264, %v265, %v256
        %v267 = vshrl.u32 %v266, 4
        %v268 = vand.u32 %v266, 15
        %v269 = vsub.s32 0, %v268
        %v270 = vsel %vm264, %v269, %v268
        %vm271 = vcmp.ne.s32.totalorder %v263, 0
        %vm272 = vcmp.ne.s32.totalorder %v270, 0
        %vm273 = vcmp.lt.s32.totalorder %v263, 0
        %vm274 = vcmp.lt.s32.totalorder %v270, 0
        %vm275 = vmand %vm273, %vm271
        %vm276 = vmand %vm274, %vm272
        %v277 = vadd.s32 %v263, 16
        %v278 = vadd.s32 %v270, 16
        %v279 = vsel %vm275, %v277, %v263
        %v280 = vsel %vm276, %v278, %v270
        %vm281 = vcmp.ge.s32.totalorder %v279, 1
        %vm282 = vcmp.ge.s32.totalorder %v280, 1
        %vm283 = vcmp.lt.s32.totalorder %v279, 15
        %vm284 = vcmp.lt.s32.totalorder %v280, 15
        %v285 = vsel %vm281, 1, 0
        %v286 = vsel %vm282, 1, 0
        %vm287 = vcmp.eq.s32.totalorder %v285, 1
        %vm288 = vcmp.eq.s32.totalorder %v286, 1
        %v289 = vsel %vm287, %v249, 0.0
        %v290 = vsel %vm288, %v250, 0.0
        %v291 = vsel %vm283, 1, 0
        %v292 = vsel %vm284, 1, 0
        %vm293 = vcmp.eq.s32.totalorder %v291, 1
        %vm294 = vcmp.eq.s32.totalorder %v292, 1
        %298 = vrot.lane.b32.xlu0 %v249, 126
        %v299 = vpop.permute.xlu0 %298
        %300 = vrot.lane.b32.xlu0 %v250, 126
        %v301 = vpop.permute.xlu0 %300
        %302 = vrot.lane.b32.xlu0 %v251, 126
        %v303 = vpop.permute.xlu0 %302
        %vm304 = vcmask 1031168
        %v305 = vsel %vm304, %v299, %v301
        %v306 = vsel %vm304, %v301, %v303
        %v309 = vsel %vm293, %v305, 0.0
        %v310 = vsel %vm294, %v306, 0.0
        %311 = vrot.lane.b32.xlu0 %v249, 112
        %v312 = vpop.permute.xlu0 %311
        %313 = vrot.lane.b32.xlu0 %v250, 112
        %v314 = vpop.permute.xlu0 %313
        %315 = vrot.lane.b32.xlu0 %v251, 112
        %v316 = vpop.permute.xlu0 %315
        %vm317 = vcmask 916480
        %v318 = vsel %vm317, %v312, %v314
        %v319 = vsel %vm317, %v314, %v316
        %v322 = vsel %vm287, %v318, 0.0
        %v323 = vsel %vm288, %v319, 0.0
        %324 = vrot.lane.b32.xlu0 %v249, 110
        %v325 = vpop.permute.xlu0 %324
        %326 = vrot.lane.b32.xlu0 %v250, 110
        %v327 = vpop.permute.xlu0 %326
        %328 = vrot.lane.b32.xlu0 %v251, 110
        %v329 = vpop.permute.xlu0 %328
        %vm330 = vcmask 900096
        %v331 = vsel %vm330, %v325, %v327
        %v332 = vsel %vm330, %v327, %v329
        %v335 = vsel %vm293, %v331, 0.0
        %v336 = vsel %vm294, %v332, 0.0
        %337 = vrot.lane.b32.xlu0 %v249, 96
        %v338 = vpop.permute.xlu0 %337
        %339 = vrot.lane.b32.xlu0 %v250, 96
        %v340 = vpop.permute.xlu0 %339
        %341 = vrot.lane.b32.xlu0 %v251, 96
        %v342 = vpop.permute.xlu0 %341
        %vm343 = vcmask 785408
        %v344 = vsel %vm343, %v338, %v340
        %v345 = vsel %vm343, %v340, %v342
        %v348 = vsel %vm287, %v344, 0.0
        %v349 = vsel %vm288, %v345, 0.0
        %350 = vrot.lane.b32.xlu0 %v249, 94
        %v351 = vpop.permute.xlu0 %350
        %352 = vrot.lane.b32.xlu0 %v250, 94
        %v353 = vpop.permute.xlu0 %352
        %354 = vrot.lane.b32.xlu0 %v251, 94
        %v355 = vpop.permute.xlu0 %354
        %vm356 = vcmask 769024
        %v357 = vsel %vm356, %v351, %v353
        %v358 = vsel %vm356, %v353, %v355
        %v361 = vsel %vm293, %v357, 0.0
        %v362 = vsel %vm294, %v358, 0.0
        %363 = vrot.lane.b32.xlu0 %v249, 127
        %v364 = vpop.permute.xlu0 %363
        %365 = vrot.lane.b32.xlu0 %v250, 127
        %v366 = vpop.permute.xlu0 %365
        %367 = vrot.lane.b32.xlu0 %v251, 127
        %v368 = vpop.permute.xlu0 %367
        %vm369 = vcmask 1039360
        %v370 = vsel %vm369, %v364, %v366
        %v371 = vsel %vm369, %v366, %v368
        %374 = vrot.lane.b32.xlu0 %v249, 111
        %v375 = vpop.permute.xlu0 %374
        %376 = vrot.lane.b32.xlu0 %v250, 111
        %v377 = vpop.permute.xlu0 %376
        %378 = vrot.lane.b32.xlu0 %v251, 111
        %v379 = vpop.permute.xlu0 %378
        %vm380 = vcmask 908288
        %v381 = vsel %vm380, %v375, %v377
        %v382 = vsel %vm380, %v377, %v379
        %385 = vrot.lane.b32.xlu0 %v249, 95
        %v386 = vpop.permute.xlu0 %385
        %387 = vrot.lane.b32.xlu0 %v250, 95
        %v388 = vpop.permute.xlu0 %387
        %389 = vrot.lane.b32.xlu0 %v251, 95
        %v390 = vpop.permute.xlu0 %389
        %vm391 = vcmask 777216
        %v392 = vsel %vm391, %v386, %v388
        %v393 = vsel %vm391, %v388, %v390
        %v396 = vld [vmem:[#allocation5] sm:$0xff]
        %v397 = vld [vmem:[#allocation5 + $0x8] sm:$0xff]
        %v398 = vld [vmem:[#allocation5 + $0x10] sm:$0xff]
        %v399 = vld [vmem:[#allocation5 + $0x18] sm:$0xff]
        %v400 = vld [vmem:[%s3] sm:$0xff]
        %v401 = vld [vmem:[%s3 + $0x8] sm:$0xff]
        %v402 = vld [vmem:[%s3 + $0x10] sm:$0xff]
        %v403 = vld [vmem:[%s3 + $0x18] sm:$0xff]
        %405 = vset.pattern.permute.xlu0 0
        %406 = vperm.xlu0 %405, %v400
        %v407 = vpop.permute.xlu0 %406
        %410 = vset.pattern.permute.xlu0 0
        %411 = vperm.xlu0 %410, %v401
        %v412 = vpop.permute.xlu0 %411
        %415 = vset.pattern.permute.xlu0 0
        %416 = vperm.xlu0 %415, %v402
        %v417 = vpop.permute.xlu0 %416
        %420 = vset.pattern.permute.xlu0 0
        %421 = vperm.xlu0 %420, %v403
        %v422 = vpop.permute.xlu0 %421
        %vm424 = vcmask 654336
        %v426 = vsel %vm424, %v396, 0
        %v429 = vsel %vm424, %v397, 0
        %v432 = vsel %vm424, %v398, 0
        %v435 = vsel %vm424, %v399, 0
        %437 = vmatprep.subr.mxu0 %v290
        %438 = vmatpush1.msra.mxu0 %v289
        %439 = vmatprep.subr.mxu0 %v371
        %440 = vmatpush1.msra.mxu0 %v370
        %441 = vmatprep.subr.mxu0 %v310
        %442 = vmatpush1.msra.mxu0 %v309
        %443 = vmatprep.subr.mxu0 %v323
        %444 = vmatpush1.msra.mxu0 %v322
        %445 = vmatprep.subr.mxu0 %v382
        %446 = vmatpush1.msra.mxu0 %v381
        %447 = vmatprep.subr.mxu0 %v336
        %448 = vmatpush1.msra.mxu0 %v335
        %449 = vmatprep.subr.mxu0 %v349
        %450 = vmatpush1.msra.mxu0 %v348
        %451 = vmatprep.subr.mxu0 %v393
        %452 = vmatpush1.msra.mxu0 %v392
        %453 = vmatprep.subr.mxu0 %v362
        %454 = vmatpush1.msra.mxu0 %v361
        %455 = vmatprep.subr.mxu0 %v253
        %456 = vmatpush1.msra.mxu0 %v252
        %457 = vmatprep.subr.mxu0 0.0
        %458 = vmatpush1.msra.mxu0 0.0
        %459 = vmatprep.subr.mxu0 0.0
        %460 = vmatpush1.msra.mxu0 0.0
        %461 = vmatprep.subr.mxu0 0.0
        %462 = vmatpush1.msra.mxu0 0.0
        %463 = vmatprep.subr.mxu0 0.0
        %464 = vmatpush1.msra.mxu0 0.0
        %465 = vmatprep.subr.mxu0 0.0
        %466 = vmatpush1.msra.mxu0 0.0
        %467 = vmatprep.subr.mxu0 0.0
        %468 = vmatpush1.msra.mxu0 0.0
        %469 = vmatprep.subr.mxu0 0.0
        %470 = vmatpush1.msra.mxu0 0.0
        %471 = vmatprep.subr.mxu0 0.0
        %472 = vmatpush1.msra.mxu0 0.0
        %473 = vmatprep.subr.mxu0 0.0
        %474 = vmatpush1.msra.mxu0 0.0
        %475 = vmatprep.subr.mxu0 0.0
        %476 = vmatpush1.msra.mxu0 0.0
        %477 = vmatprep.subr.mxu0 0.0
        %478 = vmatpush1.msra.mxu0 0.0
        %479 = vmatprep.subr.mxu0 0.0
        %480 = vmatpush1.msra.mxu0 0.0
        %481 = vmatprep.subr.mxu0 0.0
        %482 = vmatpush1.msra.mxu0 0.0
        %483 = vmatprep.subr.mxu0 0.0
        %484 = vmatpush1.msra.mxu0 0.0
        %485 = vmatprep.subr.mxu0 0.0
        %486 = vmatpush1.msra.mxu0 0.0
        %487 = vmatprep.subr.mxu0 0.0
        %488 = vmatpush1.msra.mxu0 0.0
        %489 = vmatprep.subr.mxu0 0.0
        %490 = vmatpush1.msra.mxu0 0.0
        %491 = vmatprep.subr.mxu0 0.0
        %492 = vmatpush1.msra.mxu0 0.0
        %493 = vmatprep.subr.mxu0 0.0
        %494 = vmatpush1.msra.mxu0 0.0
        %495 = vmatprep.subr.mxu0 0.0
        %496 = vmatpush1.msra.mxu0 0.0
        %497 = vmatprep.subr.mxu0 0.0
        %498 = vmatpush1.msra.mxu0 0.0
        %499 = vmatprep.subr.mxu0 0.0
        %500 = vmatpush1.msra.mxu0 0.0
        %501 = vmatprep.mubr.f32.mxu0 0.0
        %502 = vmatmul.mubr.f32.gmra.mrb[0].mxu0 %v426
        %v503 = vpop.f32.mrb[0].mxu0
        %v504 = vadd.f32 %v407, %v503
        %v505 = vpop.f32.mrb[0].mxu0
        %v506 = vadd.f32 %v407, %v505
        %507 = vmatprep.mubr.f32.mxu0 0.0
        %508 = vmatmul.mubr.f32.gmra.mrb[0].mxu0 %v429
        %v509 = vpop.f32.mrb[0].mxu0
        %v510 = vadd.f32 %v412, %v509
        %v511 = vpop.f32.mrb[0].mxu0
        %v512 = vadd.f32 %v412, %v511
        %513 = vmatprep.mubr.f32.mxu0 0.0
        %514 = vmatmul.mubr.f32.gmra.mrb[0].mxu0 %v432
        %v515 = vpop.f32.mrb[0].mxu0
        %v516 = vadd.f32 %v417, %v515
        %v517 = vpop.f32.mrb[0].mxu0
        %v518 = vadd.f32 %v417, %v517
        %519 = vmatprep.mubr.f32.mxu0 0.0
        %520 = vmatmul.mubr.f32.gmra.mrb[0].mxu0 %v435
        %v521 = vpop.f32.mrb[0].mxu0
        %v522 = vadd.f32 %v422, %v521
        %v523 = vpop.f32.mrb[0].mxu0
        %v524 = vadd.f32 %v422, %v523
        %525 = vdwg.mxu0
        %v526 = vadd.f32 %v504, %v506
        %527 = vadd.xlane.f32.xlu0 %v526
        %v528 = vpop.xlane.xlu0 %527
        %v529 = vadd.f32 %v510, %v512
        %530 = vadd.xlane.f32.xlu0 %v529
        %v531 = vpop.xlane.xlu0 %530
        %v532 = vadd.f32 %v516, %v518
        %533 = vadd.xlane.f32.xlu0 %v532
        %v534 = vpop.xlane.xlu0 %533
        %v535 = vadd.f32 %v522, %v524
        %536 = vadd.xlane.f32.xlu0 %v535
        %v537 = vpop.xlane.xlu0 %536
        %v538 = vrcp.pop 256.0
        %v539 = vmul.f32 %v528, %v538
        %v540 = vmul.f32 %v531, %v538
        %v541 = vmul.f32 %v534, %v538
        %v542 = vmul.f32 %v537, %v538
        %v543 = vmax.f32 %v539, %v540
        %v544 = vmax.f32 %v541, %v542
        %v545 = vmax.f32 %v543, %v544
        %v546 = vrot.slane %v545, 4
        %v547 = vmax.f32 %v545, %v546
        %v548 = vrot.slane %v547, 2
        %v549 = vmax.f32 %v547, %v548
        %v550 = vrot.slane %v549, 1
        %v551 = vmax.f32 %v549, %v550
        %v552 = vsub.f32 %v539, %v551
        %v553 = vsub.f32 %v540, %v551
        %v554 = vsub.f32 %v541, %v551
        %v555 = vsub.f32 %v542, %v551
        %v556 = vmul.f32 %v552, 1.442695
        %v557 = vpow.pop %v556
        %v558 = vmul.f32 %v553, 1.442695
        %v559 = vpow.pop %v558
        %v560 = vmul.f32 %v554, 1.442695
        %v561 = vpow.pop %v560
        %v562 = vmul.f32 %v555, 1.442695
        %v563 = vpow.pop %v562
        %v564 = vadd.f32 %v557, %v559
        %v565 = vadd.f32 %v564, %v561
        %v566 = vadd.f32 %v565, %v563
        %v567 = vrot.slane %v566, 4
        %v568 = vadd.f32 %v566, %v567
        %v569 = vrot.slane %v568, 2
        %v570 = vadd.f32 %v568, %v569
        %v571 = vrot.slane %v570, 1
        %v572 = vadd.f32 %v570, %v571
        %v573 = vrcp.pop %v572
        %v574 = vmul.f32 %v557, %v573
        %v575 = vmul.f32 %v559, %v573
        %v576 = vmul.f32 %v561, %v573
        %v577 = vmul.f32 %v563, %v573
        %v578 = vmul.f32 %v504, %v574
        %v579 = vmul.f32 %v506, %v574
        %v580 = vmul.f32 %v510, %v575
        %v581 = vmul.f32 %v512, %v575
        %v582 = vmul.f32 %v516, %v576
        %v583 = vmul.f32 %v518, %v576
        %v584 = vmul.f32 %v522, %v577
        %v585 = vmul.f32 %v524, %v577
        %v586 = vadd.f32 %v578, %v582
        %v587 = vadd.f32 %v579, %v583
        %v588 = vadd.f32 %v580, %v584
        %v589 = vadd.f32 %v581, %v585
        %590 = vst [vmem:[%s243] sm:$0xff] %v586
        %591 = vst [vmem:[%s243 + $0x8] sm:$0xff] %v587
        %592 = vst [vmem:[%s243 + $0x10] sm:$0xff] %v588
        %593 = vst [vmem:[%s243 + $0x18] sm:$0xff] %v589
        %s594 = sand.u32 %s124, 1
        %s595 = scalar_lea.sflag [#allocation4], %s594
        %s596 = sand.u32 %s124, 1
        %s597 = smul.addr %s596, 32
        %s598 = scalar_lea.vmem [#allocation7], %s597
        // Predicated region
        $region45: #{tpu_custom_call.1} parent=35 // pred_check
          %p599 = pneg %p134
        $region46: #{tpu_custom_call.1} parent=35 // pred_check_branch
          %601 = sbr.rel (%p599) target = $region48
        $region47: #{tpu_custom_call.1} parent=35 // pred_region
          %s603 = ssub.s32 512, 512
          %604 = vsyncadd %s595, %s603
          %s605 = smul.addr %s22, 4
          %s606 = smul.addr %s605, 128
          %s607 = scalar_lea.hbm %s4, %s606
          %s608 = sshll.u32 %s598, 4
          %s609 = int_to_ptr.vmem [resolvable:$true] %s608
          %614 = dma.vmem_to_hbm [thread:$0]  %s609, 512, %s607, %s595, 256, 256, 16
        $region48: #{tpu_custom_call.1} parent=35 // pred_fallthru
          _
      $region36: #{tpu_custom_call.1} parent=5 // pred_fallthru
        _
      %p615 = scmp.le.s32.totalorder 2, %s17
      // Predicated region
      $region49: #{tpu_custom_call.1} parent=5 // pred_check
        %p616 = pneg %p615
      $region50: #{tpu_custom_call.1} parent=5 // pred_check_branch
        %618 = sbr.rel (%p616) target = $region52
      $region51: #{tpu_custom_call.1} parent=5 // pred_region
        %s619 = ssub.s32 %s17, 2
        // Predicated region
        $region53: #{tpu_custom_call.1} parent=51 // pred_check
          %p620 = pneg %p140
        $region54: #{tpu_custom_call.1} parent=51 // pred_check_branch
          %622 = sbr.rel (%p620) target = $region56
        $region55: #{tpu_custom_call.1} parent=51 // pred_region
          %s623 = sand.u32 %s125, 1
          %s624 = scalar_lea.sflag [#allocation4], %s623
          %s625 = sand.u32 %s125, 1
          %s626 = smul.addr %s625, 32
          %s627 = scalar_lea.vmem [#allocation7], %s626
          %628 = dma.done %s624, 512
        $region56: #{tpu_custom_call.1} parent=51 // pred_fallthru
          _
      $region52: #{tpu_custom_call.1} parent=5 // pred_fallthru
        _
    $region6: #{tpu_custom_call.1} parent=1 // loop_footer
      %s21 = sadd.s32 1, %s17
    $region7: #{tpu_custom_call.1} parent=1 // loop_footer_branch
      %16 = sbr.rel target = $region3
    $region8: #{tpu_custom_call.1} parent=1 // loop_exit
      _
    %629 = vsyncpa [#allocation3], 1
    %s630 = scalar_lea.sflag [#allocation3], 1
    %631 = vsyncpa %s630, 1
    %632 = vsyncpa [#allocation6], 1
    %633 = vsyncpa [#allocation4], 1
    %s634 = scalar_lea.sflag [#allocation4], 1
    %635 = vsyncpa %s634, 1

</llo_original>
